<compile_context>
chip_gen: v7x
topology: tpu7x:2x2x1
jax: 0.10.0
libtpu: 0.0.40
codegen_flags: <defaults>
</compile_context>

<pallas_src>
import functools

import jax
import jax.numpy as jnp
from jax import lax
from jax.experimental import pallas as pl
from jax.experimental.pallas import tpu as pltpu

LANE = 128   # vreg lane width
SUB = 8      # vreg sublane count
NEG = -1e30  # softmax mask value (finite, avoids inf-inf NaNs)


# ----------------------------------------------------------------------------
# host-side helpers (parameter re-layout, run once per forward)
# ----------------------------------------------------------------------------
def _rup(n, m):
    return ((n + m - 1) // m) * m


def _pad2(a, rows, cols):
    return jnp.pad(a, ((0, rows - a.shape[0]), (0, cols - a.shape[1])))


def _bn_affine(bn, eps=1e-5):
    gamma, beta, mean, var = bn
    s = gamma / jnp.sqrt(var + eps)
    return s, beta - mean * s


def _head_block_cols(a, heads, c, c_pad):
    """Flat head layout [..., heads*c] -> padded head-block [..., heads*c_pad]."""
    parts = []
    for h in range(heads):
        blk = a[..., h * c:(h + 1) * c]
        parts.append(jnp.pad(blk, [(0, 0)] * (a.ndim - 1) + [(0, c_pad - c)]))
    return jnp.concatenate(parts, axis=-1)


def _head_block_rows(a, heads, c, c_pad):
    """Same mapping applied to the leading axis."""
    parts = []
    for h in range(heads):
        blk = a[h * c:(h + 1) * c]
        parts.append(jnp.pad(blk, [(0, c_pad - c)] + [(0, 0)] * (a.ndim - 1)))
    return jnp.concatenate(parts, axis=0)


# ----------------------------------------------------------------------------
# Stage 1: per-node projection + attention logits (computed ONCE per layer)
# ----------------------------------------------------------------------------
def _project_kernel(x_ref, w_ref, bproj_ref, asrc_ref, adst_ref,
                    xp_ref, asrc_out_ref, adst_out_ref):
    # bf16 x bf16 -> f32 accumulation on the MXU (review: bf16 MXU inputs).
    xp = jnp.dot(x_ref[...], w_ref[...],
                 preferred_element_type=jnp.float32) + bproj_ref[...]
    xp_ref[...] = xp.astype(xp_ref.dtype)            # bf16 to HBM (half the DMA)
    # All-heads attention logits in two small MXU passes (kept f32 for accuracy).
    asrc_out_ref[...] = lax.dot_general(              # [8, TM]
        asrc_ref[...], xp, (((1,), (1,)), ((), ())),
        preferred_element_type=jnp.float32)
    adst_out_ref[...] = jnp.dot(xp, adst_ref[...],    # [TM, 128]
                                preferred_element_type=jnp.float32)


def gat_project(x, w, bproj, asrc, adst, *, tile_m=256, vmem_limit_mib=96):
    n_pad, f_pad = x.shape
    hc_pad = w.shape[1]
    tm = min(tile_m, n_pad)
    assert n_pad % tm == 0

    def inv(arr):  # grid-invariant operand: resident, single-buffered
        return pl.BlockSpec(arr.shape, lambda i: (0, 0),
                            pipeline_mode=pl.Buffered(1))

    return pl.pallas_call(
        _project_kernel,
        out_shape=(jax.ShapeDtypeStruct((n_pad, hc_pad), jnp.bfloat16),
                   jax.ShapeDtypeStruct((SUB, n_pad), jnp.float32),
                   jax.ShapeDtypeStruct((n_pad, LANE), jnp.float32)),
        grid=(n_pad // tm,),
        in_specs=[pl.BlockSpec((tm, f_pad), lambda i: (i, 0)),
                  inv(w), inv(bproj), inv(asrc), inv(adst)],
        out_specs=(pl.BlockSpec((tm, hc_pad), lambda i: (i, 0)),
                   pl.BlockSpec((SUB, tm), lambda i: (0, i)),
                   pl.BlockSpec((tm, LANE), lambda i: (i, 0))),
        compiler_params=pltpu.CompilerParams(
            dimension_semantics=("parallel",),
            vmem_limit_bytes=vmem_limit_mib * 1024 * 1024),
    )(x, w, bproj, asrc, adst)


# ----------------------------------------------------------------------------
# Stage 2: masked softmax attention + aggregation (+ fused epilogue)
#          grid = (dst tiles [parallel], src tiles [arbitrary]), online softmax
# ----------------------------------------------------------------------------
def _attend_kernel(adst_ref, asrc_ref, xp_ref, adj_ref, scale_ref, shift_ref,
                   *rest, heads, c, c_pad, concat, fuse_final):
    if fuse_final:
        wf_ref, bf_ref, out_ref, acc_sc, m_sc = rest
    else:
        out_ref, acc_sc, m_sc = rest

    k = pl.program_id(1)

    @pl.when(k == 0)
    def _():
        acc_sc[...] = jnp.zeros_like(acc_sc)
        m_sc[...] = jnp.full_like(m_sc, NEG)

    # Additive adjacency mask (0 on edges, -1e30 off-edges) built once per
    # (dst, src) block from the int8 stream and shared across heads.
    neg_mask = (adj_ref[...].astype(jnp.float32) - 1.0) * 1e30

    for h in range(heads):                            # heads is tiny & static
        sl = slice(h * c_pad, (h + 1) * c_pad)
        e = adst_ref[:, h:h + 1] + asrc_ref[h:h + 1, :]           # [TM, TK]
        e = jnp.where(e > 0, e, 0.2 * e) + neg_mask               # LeakyReLU+mask
        m_prev = m_sc[:, h:h + 1]
        m_new = jnp.maximum(m_prev, jnp.max(e, axis=-1, keepdims=True))
        p = jnp.exp(e - m_new)                        # masked entries -> exact 0
        rescale = jnp.exp(m_prev - m_new)
        # One bf16 MXU pass: aggregate AND softmax denominator (xp's head block
        # carries a planted ones-column at lane `c`).
        contrib = jnp.dot(p.astype(jnp.bfloat16), xp_ref[:, sl],
                          preferred_element_type=jnp.float32)     # [TM, Cp]
        acc_sc[:, sl] = rescale * acc_sc[:, sl] + contrib
        m_sc[:, h:h + 1] = m_new

    @pl.when(k == pl.num_programs(1) - 1)
    def _():
        def elu(v):
            return jnp.where(v > 0, v, jnp.exp(jnp.minimum(v, 0.0)) - 1.0)

        if concat:
            for h in range(heads):
                sl = slice(h * c_pad, (h + 1) * c_pad)
                a = acc_sc[:, sl]
                inv_d = pl.reciprocal(jnp.maximum(a[:, c:c + 1], 1e-30),
                                      approx=True)                 # EUP
                y = (a * inv_d) * scale_ref[:, sl] + shift_ref[:, sl]
                out_ref[:, sl] = elu(y).astype(out_ref.dtype)
        else:
            agg = None
            for h in range(heads):
                sl = slice(h * c_pad, (h + 1) * c_pad)
                a = acc_sc[:, sl]
                inv_d = pl.reciprocal(jnp.maximum(a[:, c:c + 1], 1e-30),
                                      approx=True)
                agg = a * inv_d if agg is None else agg + a * inv_d
            y = agg * (1.0 / heads) * scale_ref[...] + shift_ref[...]
            y = elu(y)
            if fuse_final:                                          # fused Linear
                out_ref[...] = (jnp.dot(y.astype(jnp.bfloat16), wf_ref[...],
                                        preferred_element_type=jnp.float32)
                                + bf_ref[...]).astype(out_ref.dtype)
            else:
                out_ref[...] = y.astype(out_ref.dtype)


def gat_attend(xp, alpha_src, alpha_dst, adj, scale, shift, wf=None, bf=None, *,
               heads, c, c_pad, concat, out_dtype=jnp.float32,
               tile_m=256, tile_k=512, vmem_limit_mib=96):
    n_pad, hc_pad = xp.shape
    fuse_final = wf is not None
    d_out = hc_pad if concat else (wf.shape[1] if fuse_final else c_pad)
    tm = min(tile_m, n_pad)
    tk = min(tile_k, n_pad)
    assert n_pad % tm == 0 and n_pad % tk == 0

    kernel = functools.partial(_attend_kernel, heads=heads, c=c, c_pad=c_pad,
                               concat=concat, fuse_final=fuse_final)

    def inv(arr):  # grid-invariant operand: resident, single-buffered
        return pl.BlockSpec(arr.shape, lambda i, k: (0, 0),
                            pipeline_mode=pl.Buffered(1))

    in_specs = [
        pl.BlockSpec((tm, LANE), lambda i, k: (i, 0)),     # alpha_dst (dst tile)
        pl.BlockSpec((SUB, tk), lambda i, k: (0, k)),      # alpha_src (src slab)
        pl.BlockSpec((tk, hc_pad), lambda i, k: (k, 0)),   # xp (src slab, bf16)
        pl.BlockSpec((tm, tk), lambda i, k: (i, k)),       # adjacency (int8)
        inv(scale), inv(shift),
    ]
    args = [alpha_dst, alpha_src, xp, adj, scale, shift]
    if fuse_final:
        in_specs += [inv(wf), inv(bf)]
        args += [wf, bf]

    return pl.pallas_call(
        kernel,
        out_shape=jax.ShapeDtypeStruct((n_pad, d_out), out_dtype),
        grid=(n_pad // tm, n_pad // tk),
        in_specs=in_specs,
        out_specs=pl.BlockSpec((tm, d_out), lambda i, k: (i, 0)),
        scratch_shapes=[pltpu.VMEM((tm, hc_pad), jnp.float32),  # acc (+ denom lanes)
                        pltpu.VMEM((tm, LANE), jnp.float32)],   # running max / head
        compiler_params=pltpu.CompilerParams(
            # TODO(synk): on v7x verify megacore sharding of the dst axis; if
            # plain "parallel" does not engage, switch to pltpu.CORE_PARALLEL.
            dimension_semantics=("parallel", "arbitrary"),
            vmem_limit_bytes=vmem_limit_mib * 1024 * 1024),
    )(*args)


# ----------------------------------------------------------------------------
# Full GAT forward (eval mode)
# ----------------------------------------------------------------------------
def gat_forward(x, adj, params, *, heads, hidden,
                tile_m=256, tile_k=512, vmem_limit_mib=96):
    n, in_ch = x.shape
    c = hidden
    c_pad = _rup(c + 1, LANE)          # +1 reserves a free lane for the ones-column
    hc_pad = heads * c_pad
    n_pad = _rup(n, LANE)
    f1_pad = _rup(in_ch, LANE)
    out_ch = params["wf"].shape[1]
    out_pad = _rup(out_ch, LANE)
    assert 1 <= heads <= SUB, "head packing uses one sublane/lane per head (<= 8)"

    f32, bf16 = jnp.float32, jnp.bfloat16
    kw1 = dict(tile_m=tile_m, vmem_limit_mib=vmem_limit_mib)
    kw2 = dict(tile_m=tile_m, tile_k=tile_k, vmem_limit_mib=vmem_limit_mib)

    x_bf = _pad2(x.astype(f32), n_pad, f1_pad).astype(bf16)
    adj_i8 = (_pad2(adj.astype(f32), n_pad, n_pad) > 0).astype(jnp.int8)

    # ones-column planted via b_proj (free padded lane `c` of each head block)
    ones_lane = jnp.zeros((1, hc_pad), f32)
    for h in range(heads):
        ones_lane = ones_lane.at[0, h * c_pad + c].set(1.0)

    # ---- layer 1: GATConv(in -> hidden, heads, concat=True); input BN folded into W1
    s1, t1 = _bn_affine(params["bn1"])
    w1 = params["w1"] * s1[:, None]
    w1_blk = _pad2(_head_block_cols(w1, heads, c, c_pad), f1_pad, hc_pad).astype(bf16)
    bproj1 = _head_block_cols((t1 @ params["w1"])[None, :], heads, c, c_pad) + ones_lane

    asrc1 = jnp.zeros((SUB, hc_pad), f32)
    adst1 = jnp.zeros((hc_pad, LANE), f32)
    for h in range(heads):
        asrc1 = asrc1.at[h, h * c_pad:h * c_pad + c].set(params["att_src1"][h])
        adst1 = adst1.at[h * c_pad:h * c_pad + c, h].set(params["att_dst1"][h])

    sb1, tb1 = _bn_affine(params["bn_h1"])
    scale1 = _head_block_cols(sb1[None, :], heads, c, c_pad)
    shift1 = _head_block_cols(params["bias1"] * sb1[None, :] + tb1[None, :],
                              heads, c, c_pad)

    xp1, as1, ad1 = gat_project(x_bf, w1_blk, bproj1, asrc1, adst1, **kw1)
    h1 = gat_attend(xp1, as1, ad1, adj_i8, scale1, shift1,
                    heads=heads, c=c, c_pad=c_pad, concat=True,
                    out_dtype=bf16, **kw2)

    # ---- layer 2: GATConv(hidden*heads -> hidden, heads, concat=False)
    #      with bias + BN + ELU + final Linear fused into its epilogue
    w2_blk = _head_block_cols(_head_block_rows(params["w2"], heads, c, c_pad),
                              heads, c, c_pad).astype(bf16)
    bproj2 = ones_lane

    asrc2 = jnp.zeros((SUB, hc_pad), f32)
    adst2 = jnp.zeros((hc_pad, LANE), f32)
    for h in range(heads):
        asrc2 = asrc2.at[h, h * c_pad:h * c_pad + c].set(params["att_src2"][h])
        adst2 = adst2.at[h * c_pad:h * c_pad + c, h].set(params["att_dst2"][h])

    sb2, tb2 = _bn_affine(params["bn_h2"])
    scale2 = jnp.pad(sb2[None, :], ((0, 0), (0, c_pad - c)))
    shift2 = jnp.pad(params["bias2"] * sb2[None, :] + tb2[None, :],
                     ((0, 0), (0, c_pad - c)))

    wf_bf = _pad2(params["wf"], c_pad, out_pad).astype(bf16)
    bf_p = _pad2(params["bf"], 1, out_pad)

    xp2, as2, ad2 = gat_project(h1, w2_blk, bproj2, asrc2, adst2, **kw1)
    out = gat_attend(xp2, as2, ad2, adj_i8, scale2, shift2, wf_bf, bf_p,
                     heads=heads, c=c, c_pad=c_pad, concat=False,
                     out_dtype=f32, **kw2)
    return out[:n, :out_ch]


# ----------------------------------------------------------------------------
# Pure-JAX reference (eval-mode GAT) for a numerical sanity check
# ----------------------------------------------------------------------------
def _ref_forward(x, adj, params, *, heads, hidden):
    def bn(v, p, eps=1e-5):
        g, b, m, var = p
        return (v - m) / jnp.sqrt(var + eps) * g + b

    def elu(v):
        return jnp.where(v > 0, v, jnp.expm1(v))

    def conv(v, w, a_s, a_d, bias, concat):
        xp = v @ w
        outs = []
        for h in range(heads):
            xh = xp[:, h * hidden:(h + 1) * hidden]
            e = (xh @ a_d[h])[:, None] + (xh @ a_s[h])[None, :]
            e = jnp.where(e > 0, e, 0.2 * e)
            e = jnp.where(adj > 0, e, -1e30)
            e = e - e.max(axis=-1, keepdims=True)
            p = jnp.where(adj > 0, jnp.exp(e), 0.0)
            p = p / p.sum(axis=-1, keepdims=True)
            outs.append(p @ xh)
        o = jnp.concatenate(outs, -1) if concat else sum(outs) / heads
        return o + bias

    v = bn(x, params["bn1"])
    v = conv(v, params["w1"], params["att_src1"], params["att_dst1"],
             params["bias1"], True)
    v = elu(bn(v, params["bn_h1"]))
    v = conv(v, params["w2"], params["att_src2"], params["att_dst2"],
             params["bias2"], False)
    v = elu(bn(v, params["bn_h2"]))
    return v @ params["wf"] + params["bf"]


# ----------------------------------------------------------------------------
# Main
# ----------------------------------------------------------------------------
if __name__ == "__main__":
    N = 16            # number of nodes
    IN_CH = 8
    HIDDEN = 16
    OUT_CH = 4
    HEADS = 2

    key = jax.random.PRNGKey(0)
    keys = jax.random.split(key, 12)

    x = jax.random.normal(keys[0], (N, IN_CH), dtype=jnp.float32)

    # ring graph (both directions) plus self-loops (PyG GATConv adds them)
    src = jnp.arange(N)
    dst = (src + 1) % N
    adj = jnp.zeros((N, N), dtype=jnp.float32)
    adj = adj.at[dst, src].set(1.0)
    adj = adj.at[src, dst].set(1.0)
    adj = adj.at[src, src].set(1.0)

    def init(k, shape, scale=0.1):
        return scale * jax.random.normal(k, shape, dtype=jnp.float32)

    params = {
        "w1":       init(keys[1], (IN_CH, HEADS * HIDDEN)),
        "att_src1": init(keys[2], (HEADS, HIDDEN)),
        "att_dst1": init(keys[3], (HEADS, HIDDEN)),
        "bias1":    init(keys[4], (1, HEADS * HIDDEN)),
        "w2":       init(keys[5], (HEADS * HIDDEN, HEADS * HIDDEN)),
        "att_src2": init(keys[6], (HEADS, HIDDEN)),
        "att_dst2": init(keys[7], (HEADS, HIDDEN)),
        "bias2":    init(keys[8], (1, HIDDEN)),
        "wf":       init(keys[9], (HIDDEN, OUT_CH)),
        "bf":       init(keys[10], (1, OUT_CH)),
        # BatchNorm1d (eval): gamma, beta, running_mean, running_var
        "bn1":   (jnp.ones((IN_CH,)), jnp.zeros((IN_CH,)),
                  jnp.zeros((IN_CH,)), jnp.ones((IN_CH,))),
        "bn_h1": (jnp.ones((HEADS * HIDDEN,)), jnp.zeros((HEADS * HIDDEN,)),
                  jnp.zeros((HEADS * HIDDEN,)), jnp.ones((HEADS * HIDDEN,))),
        "bn_h2": (jnp.ones((HIDDEN,)), jnp.zeros((HIDDEN,)),
                  jnp.zeros((HIDDEN,)), jnp.ones((HIDDEN,))),
    }

    out = gat_forward(x, adj, params, heads=HEADS, hidden=HIDDEN)
    out = jax.block_until_ready(out)
    assert out.shape == (N, OUT_CH), out.shape
    assert bool(jnp.all(jnp.isfinite(out)))

    ref = _ref_forward(x, adj, params, heads=HEADS, hidden=HIDDEN)
    assert bool(jnp.allclose(out, ref, rtol=5e-2, atol=5e-2)), \
        float(jnp.max(jnp.abs(out - ref)))

    print("KERNEL_OK")
</pallas_src>

<mosaic_0001>
module attributes {stable_mosaic.version = 11 : i64} {
  func.func @_project_kernel(%arg0: i32, %arg1: memref<128x128xbf16, #tpu.memory_space<vmem>>, %arg2: memref<128x256xbf16, #tpu.memory_space<vmem>>, %arg3: memref<1x256xf32, #tpu.memory_space<vmem>>, %arg4: memref<8x256xf32, #tpu.memory_space<vmem>>, %arg5: memref<256x128xf32, #tpu.memory_space<vmem>>, %arg6: memref<128x256xbf16, #tpu.memory_space<vmem>>, %arg7: memref<8x128xf32, #tpu.memory_space<vmem>>, %arg8: memref<128x128xf32, #tpu.memory_space<vmem>>) attributes {dimension_semantics = [#tpu.dimension_semantics<parallel>], iteration_bounds = array<i64: 1>, scalar_prefetch = 0 : i64, scratch_operands = 0 : i64, tpu.core_type = #tpu.core_type<tc>, window_params = [{transform_indices = @transform_0, window_bounds = array<i64: 128, 128>}, {pipeline_mode = #tpu.pipeline_mode<synchronous>, transform_indices = @transform_1, window_bounds = array<i64: 128, 256>}, {pipeline_mode = #tpu.pipeline_mode<synchronous>, transform_indices = @transform_2, window_bounds = array<i64: 1, 256>}, {pipeline_mode = #tpu.pipeline_mode<synchronous>, transform_indices = @transform_3, window_bounds = array<i64: 8, 256>}, {pipeline_mode = #tpu.pipeline_mode<synchronous>, transform_indices = @transform_4, window_bounds = array<i64: 256, 128>}, {transform_indices = @transform_5, window_bounds = array<i64: 128, 256>}, {transform_indices = @transform_6, window_bounds = array<i64: 8, 128>}, {transform_indices = @transform_7, window_bounds = array<i64: 128, 128>}]} {
    %c0 = arith.constant 0 : index
    %c0_0 = arith.constant 0 : index
    %0 = vector.load %arg1[%c0, %c0_0] : memref<128x128xbf16, #tpu.memory_space<vmem>>, vector<128x128xbf16>
    %c0_1 = arith.constant 0 : index
    %c0_2 = arith.constant 0 : index
    %1 = vector.load %arg2[%c0_1, %c0_2] : memref<128x256xbf16, #tpu.memory_space<vmem>>, vector<128x256xbf16>
    %cst = arith.constant dense<0.000000e+00> : vector<128x256xf32>
    %2 = tpu.matmul %0, %1, %cst {dimension_numbers = #tpu.dot_dimension_numbers<[1], [0], [0], [1], [0, 0, 1, 1], [], []>} : vector<128x128xbf16>, vector<128x256xbf16>, vector<128x256xf32> -> vector<128x256xf32>
    %c0_3 = arith.constant 0 : index
    %c0_4 = arith.constant 0 : index
    %3 = vector.load %arg3[%c0_3, %c0_4] : memref<1x256xf32, #tpu.memory_space<vmem>>, vector<1x256xf32>
    %4 = vector.broadcast %3 : vector<1x256xf32> to vector<128x256xf32>
    %5 = arith.addf %2, %4 : vector<128x256xf32>
    %6 = arith.truncf %5 : vector<128x256xf32> to vector<128x256xbf16>
    %c0_5 = arith.constant 0 : index
    %c0_6 = arith.constant 0 : index
    %7 = vector.load %arg6[%c0_5, %c0_6] : memref<128x256xbf16, #tpu.memory_space<vmem>>, vector<128x256xbf16>
    tpu.vector_store %arg6[%c0_5, %c0_6], %6 {strides = array<i32>} : memref<128x256xbf16, #tpu.memory_space<vmem>>, vector<128x256xbf16>,
    %c0_7 = arith.constant 0 : index
    %c0_8 = arith.constant 0 : index
    %8 = vector.load %arg4[%c0_7, %c0_8] : memref<8x256xf32, #tpu.memory_space<vmem>>, vector<8x256xf32>
    %cst_9 = arith.constant dense<0.000000e+00> : vector<8x128xf32>
    %9 = tpu.matmul %8, %5, %cst_9 {dimension_numbers = #tpu.dot_dimension_numbers<[1], [1], [0], [0], [0, 0, 1, 0], [], []>} : vector<8x256xf32>, vector<128x256xf32>, vector<8x128xf32> -> vector<8x128xf32>
    %c0_10 = arith.constant 0 : index
    %c0_11 = arith.constant 0 : index
    %10 = vector.load %arg7[%c0_10, %c0_11] : memref<8x128xf32, #tpu.memory_space<vmem>>, vector<8x128xf32>
    tpu.vector_store %arg7[%c0_10, %c0_11], %9 {strides = array<i32>} : memref<8x128xf32, #tpu.memory_space<vmem>>, vector<8x128xf32>,
    %c0_12 = arith.constant 0 : index
    %c0_13 = arith.constant 0 : index
    %11 = vector.load %arg5[%c0_12, %c0_13] : memref<256x128xf32, #tpu.memory_space<vmem>>, vector<256x128xf32>
    %cst_14 = arith.constant dense<0.000000e+00> : vector<128x128xf32>
    %12 = tpu.matmul %5, %11, %cst_14 {dimension_numbers = #tpu.dot_dimension_numbers<[1], [0], [0], [1], [0, 0, 1, 1], [], []>} : vector<128x256xf32>, vector<256x128xf32>, vector<128x128xf32> -> vector<128x128xf32>
    %c0_15 = arith.constant 0 : index
    %c0_16 = arith.constant 0 : index
    %13 = vector.load %arg8[%c0_15, %c0_16] : memref<128x128xf32, #tpu.memory_space<vmem>>, vector<128x128xf32>
    tpu.vector_store %arg8[%c0_15, %c0_16], %12 {strides = array<i32>} : memref<128x128xf32, #tpu.memory_space<vmem>>, vector<128x128xf32>,
    return
  }
  func.func @transform_0(%arg0: i32) -> (i32, i32) {
    %c0_i32 = arith.constant 0 : i32
    %c0_i32_0 = arith.constant 0 : i32
    return %arg0, %c0_i32 : i32, i32
  }
  func.func @transform_1(%arg0: i32) -> (i32, i32) {
    %c0_i32 = arith.constant 0 : i32
    %c0_i32_0 = arith.constant 0 : i32
    %c0_i32_1 = arith.constant 0 : i32
    return %c0_i32, %c0_i32_0 : i32, i32
  }
  func.func @transform_2(%arg0: i32) -> (i32, i32) {
    %c0_i32 = arith.constant 0 : i32
    %c0_i32_0 = arith.constant 0 : i32
    %c0_i32_1 = arith.constant 0 : i32
    return %c0_i32, %c0_i32_0 : i32, i32
  }
  func.func @transform_3(%arg0: i32) -> (i32, i32) {
    %c0_i32 = arith.constant 0 : i32
    %c0_i32_0 = arith.constant 0 : i32
    %c0_i32_1 = arith.constant 0 : i32
    return %c0_i32, %c0_i32_0 : i32, i32
  }
  func.func @transform_4(%arg0: i32) -> (i32, i32) {
    %c0_i32 = arith.constant 0 : i32
    %c0_i32_0 = arith.constant 0 : i32
    %c0_i32_1 = arith.constant 0 : i32
    return %c0_i32, %c0_i32_0 : i32, i32
  }
  func.func @transform_5(%arg0: i32) -> (i32, i32) {
    %c0_i32 = arith.constant 0 : i32
    %c0_i32_0 = arith.constant 0 : i32
    return %arg0, %c0_i32 : i32, i32
  }
  func.func @transform_6(%arg0: i32) -> (i32, i32) {
    %c0_i32 = arith.constant 0 : i32
    %c0_i32_0 = arith.constant 0 : i32
    return %c0_i32, %arg0 : i32, i32
  }
  func.func @transform_7(%arg0: i32) -> (i32, i32) {
    %c0_i32 = arith.constant 0 : i32
    %c0_i32_0 = arith.constant 0 : i32
    return %arg0, %c0_i32 : i32, i32
  }
}

</mosaic_0001>

<llo_original>
// kernel: tpu_custom_call.1
$region0: #{tpu_custom_call.1}
  #allocation0 [shape = 'u32[]', space=smem, size = 0x4, offset = 0x4, fixed_abs, tag = 'smem constant byte address 0x4 - core index']
  #allocation1 [shape = 'u32[144,128]{1,0:T(1,128)}', space=vmem, size = 0x12000, scoped, tag = 'internal scratch']
  %s0 = inlined_call_operand.hbm [shape: bf16[128,128], index: 0, kind: input, shape index: {}]
  %s1 = inlined_call_operand.hbm [shape: bf16[128,256], index: 1, kind: input, shape index: {}]
  %s2 = inlined_call_operand.hbm [shape: f32[1,256], index: 2, kind: input, shape index: {}]
  %s3 = inlined_call_operand.hbm [shape: f32[8,256], index: 3, kind: input, shape index: {}]
  %s4 = inlined_call_operand.hbm [shape: f32[256,128], index: 4, kind: input, shape index: {}]
  %s5 = inlined_call_operand.hbm [shape: bf16[128,256], index: 5, kind: output, shape index: {0}]
  %s6 = inlined_call_operand.hbm [shape: f32[8,128], index: 6, kind: output, shape index: {1}]
  %s7 = inlined_call_operand.hbm [shape: f32[128,128], index: 7, kind: output, shape index: {2}]
  %8 = xla_tuple %s5, %s6, %s7
  %s9 = sld [smem:[#allocation0]]
  $region66: #{tpu_custom_call.1} parent=0
    _
  %s11 = ssub.s32 1, %s9
  %s12 = scalar_select 0, %s11, %s9
  $region1: #{tpu_custom_call.1} parent=0
    #allocation2 [shape = 'u8[32768]{0}', space=vmem, size = 0x8000, scoped, tag = 'input window, operand 0, single buffered']
    #allocation3 [shape = 's32[1]{0}', space=sflag, size = 0x4, scoped, tag = 'scoped memory for tpu_custom_call.1']
    #allocation4 [shape = 's32[1]{0}', space=sflag, size = 0x4, scoped, tag = 'scoped memory for tpu_custom_call.1']
    #allocation5 [shape = 'u8[65536]{0}', space=vmem, size = 0x10000, scoped, tag = 'input window, operand 1, single buffered']
    #allocation6 [shape = 's32[1]{0}', space=sflag, size = 0x4, scoped, tag = 'scoped memory for tpu_custom_call.1']
    #allocation7 [shape = 'u8[1024]{0}', space=vmem, size = 0x400, scoped, tag = 'input window, operand 2, single buffered']
    #allocation8 [shape = 'u8[8192]{0}', space=vmem, size = 0x2000, scoped, tag = 'input window, operand 3, single buffered']
    #allocation9 [shape = 's32[1]{0}', space=sflag, size = 0x4, scoped, tag = 'scoped memory for tpu_custom_call.1']
    #allocation10 [shape = 'u8[131072]{0}', space=vmem, size = 0x20000, scoped, tag = 'input window, operand 4, single buffered']
    #allocation11 [shape = 'u8[65536]{0}', space=vmem, size = 0x10000, scoped, tag = 'output window, operand 0, single buffered']
    #allocation12 [shape = 'u8[4096]{0}', space=vmem, size = 0x1000, scoped, tag = 'output window, operand 1, single buffered']
    #allocation13 [shape = 's32[1]{0}', space=sflag, size = 0x4, scoped, tag = 'scoped memory for tpu_custom_call.1']
    #allocation14 [shape = 'u8[65536]{0}', space=vmem, size = 0x10000, scoped, tag = 'output window, operand 2, single buffered']
    %13 = vsyncpa [#allocation3], 0
    %14 = vsyncpa [#allocation6], 0
    %15 = vsyncpa [#allocation9], 0
    %16 = vsyncpa [#allocation4], 0
    %17 = vsyncpa [#allocation13], 0
    // Predicated region
    $region2: #{tpu_custom_call.1} parent=1 // pred_check
      _
    $region3: #{tpu_custom_call.1} parent=1 // pred_check_branch
      %19 = sbr.rel (0) target = $region5
    $region4: #{tpu_custom_call.1} parent=1 // pred_region
      %s21 = ssub.s32 1024, 1024
      %22 = vsyncadd [#allocation3], %s21
      %s23 = sshll.u32 [#allocation2], 4
      %s24 = int_to_ptr.vmem [resolvable:$true] %s23
      %29 = dma.hbm_to_vmem [thread:$0]  %s0, 1024, %s24, [#allocation3], 64, 64, 4
    $region5: #{tpu_custom_call.1} parent=1 // pred_fallthru
      _
    // Predicated region
    $region6: #{tpu_custom_call.1} parent=1 // pred_check
      _
    $region7: #{tpu_custom_call.1} parent=1 // pred_check_branch
      %31 = sbr.rel (0) target = $region9
    $region8: #{tpu_custom_call.1} parent=1 // pred_region
      %s33 = ssub.s32 2048, 2048
      %34 = vsyncadd [#allocation6], %s33
      %s35 = sshll.u32 [#allocation5], 4
      %s36 = int_to_ptr.vmem [resolvable:$true] %s35
      %41 = dma.hbm_to_vmem [thread:$0]  %s1, 2048, %s36, [#allocation6], 128, 128, 8
    $region9: #{tpu_custom_call.1} parent=1 // pred_fallthru
      _
    // Predicated region
    $region10: #{tpu_custom_call.1} parent=1 // pred_check
      _
    $region11: #{tpu_custom_call.1} parent=1 // pred_check_branch
      %43 = sbr.rel (0) target = $region13
    $region12: #{tpu_custom_call.1} parent=1 // pred_region
      %s45 = ssub.s32 32, 32
      %46 = vsyncadd [#allocation6], %s45
      %s48 = sshll.u32 [#allocation7], 4
      %s49 = int_to_ptr.vmem [resolvable:$true] %s48
      %51 = dma.hbm_to_vmem [thread:$0]  %s2, 32, %s49, [#allocation6]
    $region13: #{tpu_custom_call.1} parent=1 // pred_fallthru
      _
    // Predicated region
    $region14: #{tpu_custom_call.1} parent=1 // pred_check
      _
    $region15: #{tpu_custom_call.1} parent=1 // pred_check_branch
      %53 = sbr.rel (0) target = $region17
    $region16: #{tpu_custom_call.1} parent=1 // pred_region
      %s55 = ssub.s32 256, 256
      %56 = vsyncadd [#allocation9], %s55
      %s58 = sshll.u32 [#allocation8], 4
      %s59 = int_to_ptr.vmem [resolvable:$true] %s58
      %61 = dma.hbm_to_vmem [thread:$0]  %s3, 256, %s59, [#allocation9]
    $region17: #{tpu_custom_call.1} parent=1 // pred_fallthru
      _
    // Predicated region
    $region18: #{tpu_custom_call.1} parent=1 // pred_check
      _
    $region19: #{tpu_custom_call.1} parent=1 // pred_check_branch
      %63 = sbr.rel (0) target = $region21
    $region20: #{tpu_custom_call.1} parent=1 // pred_region
      %s65 = ssub.s32 4096, 4096
      %66 = vsyncadd [#allocation9], %s65
      %s67 = sshll.u32 [#allocation10], 4
      %s68 = int_to_ptr.vmem [resolvable:$true] %s67
      %73 = dma.hbm_to_vmem [thread:$0]  %s4, 4096, %s68, [#allocation9], 128, 128, 8
    $region21: #{tpu_custom_call.1} parent=1 // pred_fallthru
      _
    // Predicated region
    $region22: #{tpu_custom_call.1} parent=1 // pred_check
      _
    $region23: #{tpu_custom_call.1} parent=1 // pred_check_branch
      %75 = sbr.rel (0) target = $region25
    $region24: #{tpu_custom_call.1} parent=1 // pred_region
      %76 = dma.done [#allocation3], 1024
    $region25: #{tpu_custom_call.1} parent=1 // pred_fallthru
      _
    // Predicated region
    $region26: #{tpu_custom_call.1} parent=1 // pred_check
      _
    $region27: #{tpu_custom_call.1} parent=1 // pred_check_branch
      %78 = sbr.rel (0) target = $region29
    $region28: #{tpu_custom_call.1} parent=1 // pred_region
      %79 = dma.done [#allocation6], 2048
    $region29: #{tpu_custom_call.1} parent=1 // pred_fallthru
      _
    // Predicated region
    $region30: #{tpu_custom_call.1} parent=1 // pred_check
      _
    $region31: #{tpu_custom_call.1} parent=1 // pred_check_branch
      %81 = sbr.rel (0) target = $region33
    $region32: #{tpu_custom_call.1} parent=1 // pred_region
      %82 = dma.done [#allocation6], 32
    $region33: #{tpu_custom_call.1} parent=1 // pred_fallthru
      _
    // Predicated region
    $region34: #{tpu_custom_call.1} parent=1 // pred_check
      _
    $region35: #{tpu_custom_call.1} parent=1 // pred_check_branch
      %84 = sbr.rel (0) target = $region37
    $region36: #{tpu_custom_call.1} parent=1 // pred_region
      %85 = dma.done [#allocation9], 256
    $region37: #{tpu_custom_call.1} parent=1 // pred_fallthru
      _
    // Predicated region
    $region38: #{tpu_custom_call.1} parent=1 // pred_check
      _
    $region39: #{tpu_custom_call.1} parent=1 // pred_check_branch
      %87 = sbr.rel (0) target = $region41
    $region40: #{tpu_custom_call.1} parent=1 // pred_region
      %88 = dma.done [#allocation9], 4096
    $region41: #{tpu_custom_call.1} parent=1 // pred_fallthru
      _
    %v90 = vld [vmem:[#allocation2] sm:$0xf]
    %v91 = vld [vmem:[#allocation2 + $0x4] sm:$0xf]
    %v92 = vld [vmem:[#allocation2 + $0x8] sm:$0xf]
    %v93 = vld [vmem:[#allocation2 + $0xc] sm:$0xf]
    %v94 = vld [vmem:[#allocation2 + $0x10] sm:$0xf]
    %v95 = vld [vmem:[#allocation2 + $0x14] sm:$0xf]
    %v96 = vld [vmem:[#allocation2 + $0x18] sm:$0xf]
    %v97 = vld [vmem:[#allocation2 + $0x1c] sm:$0xf]
    %v98 = vld [vmem:[#allocation2 + $0x20] sm:$0xf]
    %v99 = vld [vmem:[#allocation2 + $0x24] sm:$0xf]
    %v100 = vld [vmem:[#allocation2 + $0x28] sm:$0xf]
    %v101 = vld [vmem:[#allocation2 + $0x2c] sm:$0xf]
    %v102 = vld [vmem:[#allocation2 + $0x30] sm:$0xf]
    %v103 = vld [vmem:[#allocation2 + $0x34] sm:$0xf]
    %v104 = vld [vmem:[#allocation2 + $0x38] sm:$0xf]
    %v105 = vld [vmem:[#allocation2 + $0x3c] sm:$0xf]
    %v106 = vld [vmem:[#allocation5] sm:$0xff]
    %v107 = vld [vmem:[#allocation5 + $0x8] sm:$0xff]
    %v108 = vld [vmem:[#allocation5 + $0x10] sm:$0xff]
    %v109 = vld [vmem:[#allocation5 + $0x18] sm:$0xff]
    %v110 = vld [vmem:[#allocation5 + $0x20] sm:$0xff]
    %v111 = vld [vmem:[#allocation5 + $0x28] sm:$0xff]
    %v112 = vld [vmem:[#allocation5 + $0x30] sm:$0xff]
    %v113 = vld [vmem:[#allocation5 + $0x38] sm:$0xff]
    %v114 = vld [vmem:[#allocation5 + $0x40] sm:$0xff]
    %v115 = vld [vmem:[#allocation5 + $0x48] sm:$0xff]
    %v116 = vld [vmem:[#allocation5 + $0x50] sm:$0xff]
    %v117 = vld [vmem:[#allocation5 + $0x58] sm:$0xff]
    %v118 = vld [vmem:[#allocation5 + $0x60] sm:$0xff]
    %v119 = vld [vmem:[#allocation5 + $0x68] sm:$0xff]
    %v120 = vld [vmem:[#allocation5 + $0x70] sm:$0xff]
    %v121 = vld [vmem:[#allocation5 + $0x78] sm:$0xff]
    %v122 = vld [vmem:[#allocation7] sm:$0x3]
    %v124 = vlaneseq
    %v125 = vshrl.u32 %v124, 7
    %v126 = vsub.s32 0, %v125
    %v127 = vrot.slane %v122, %v126
    %v128 = vlaneseq
    %v129 = vshrl.u32 %v128, 7
    %v130 = vsub.s32 1, %v129
    %v131 = vrot.slane %v122, %v130
    %v150 = vunpack.c.l.b16 %v90
    %v151 = vunpack.c.l.b16 %v91
    %v152 = vunpack.c.l.b16 %v92
    %v153 = vunpack.c.l.b16 %v93
    %v154 = vunpack.c.l.b16 %v94
    %v155 = vunpack.c.l.b16 %v95
    %v156 = vunpack.c.l.b16 %v96
    %v157 = vunpack.c.l.b16 %v97
    %v158 = vunpack.c.l.b16 %v98
    %v159 = vunpack.c.l.b16 %v99
    %v160 = vunpack.c.l.b16 %v100
    %v161 = vunpack.c.l.b16 %v101
    %v162 = vunpack.c.l.b16 %v102
    %v163 = vunpack.c.l.b16 %v103
    %v164 = vunpack.c.l.b16 %v104
    %v165 = vunpack.c.l.b16 %v105
    %v166 = vpack.c.b16 %v151, %v150
    %v167 = vpack.c.b16 %v153, %v152
    %v168 = vpack.c.b16 %v155, %v154
    %v169 = vpack.c.b16 %v157, %v156
    %v170 = vpack.c.b16 %v159, %v158
    %v171 = vpack.c.b16 %v161, %v160
    %v172 = vpack.c.b16 %v163, %v162
    %v173 = vpack.c.b16 %v165, %v164
    %v198 = vunpack.c.l.b16 %v106
    %v199 = vunpack.c.h.b16 %v106
    %v200 = vunpack.c.l.b16 %v107
    %v201 = vunpack.c.h.b16 %v107
    %v202 = vunpack.c.l.b16 %v108
    %v203 = vunpack.c.h.b16 %v108
    %v204 = vunpack.c.l.b16 %v109
    %v205 = vunpack.c.h.b16 %v109
    %v206 = vunpack.c.l.b16 %v110
    %v207 = vunpack.c.h.b16 %v110
    %v208 = vunpack.c.l.b16 %v111
    %v209 = vunpack.c.h.b16 %v111
    %v210 = vunpack.c.l.b16 %v112
    %v211 = vunpack.c.h.b16 %v112
    %v212 = vunpack.c.l.b16 %v113
    %v213 = vunpack.c.h.b16 %v113
    %v214 = vunpack.c.l.b16 %v114
    %v215 = vunpack.c.h.b16 %v114
    %v216 = vunpack.c.l.b16 %v115
    %v217 = vunpack.c.h.b16 %v115
    %v218 = vunpack.c.l.b16 %v116
    %v219 = vunpack.c.h.b16 %v116
    %v220 = vunpack.c.l.b16 %v117
    %v221 = vunpack.c.h.b16 %v117
    %v222 = vunpack.c.l.b16 %v118
    %v223 = vunpack.c.h.b16 %v118
    %v224 = vunpack.c.l.b16 %v119
    %v225 = vunpack.c.h.b16 %v119
    %v226 = vunpack.c.l.b16 %v120
    %v227 = vunpack.c.h.b16 %v120
    %v228 = vunpack.c.l.b16 %v121
    %v229 = vunpack.c.h.b16 %v121
    %v230 = vpack.c.b16 %v200, %v198
    %v231 = vpack.c.b16 %v201, %v199
    %v232 = vpack.c.b16 %v204, %v202
    %v233 = vpack.c.b16 %v205, %v203
    %v234 = vpack.c.b16 %v208, %v206
    %v235 = vpack.c.b16 %v209, %v207
    %v236 = vpack.c.b16 %v212, %v210
    %v237 = vpack.c.b16 %v213, %v211
    %v238 = vpack.c.b16 %v216, %v214
    %v239 = vpack.c.b16 %v217, %v215
    %v240 = vpack.c.b16 %v220, %v218
    %v241 = vpack.c.b16 %v221, %v219
    %v242 = vpack.c.b16 %v224, %v222
    %v243 = vpack.c.b16 %v225, %v223
    %v244 = vpack.c.b16 %v228, %v226
    %v245 = vpack.c.b16 %v229, %v227
    %262 = vmatprep.subr.bf16.mxu0 %v231
    %263 = vmatpush1.bf16.msra.mxu0 %v230
    %264 = vmatprep.subr.bf16.mxu0 %v233
    %265 = vmatpush1.bf16.msra.mxu0 %v232
    %266 = vmatprep.subr.bf16.mxu0 %v235
    %267 = vmatpush1.bf16.msra.mxu0 %v234
    %268 = vmatprep.subr.bf16.mxu0 %v237
    %269 = vmatpush1.bf16.msra.mxu0 %v236
    %270 = vmatprep.subr.bf16.mxu0 %v239
    %271 = vmatpush1.bf16.msra.mxu0 %v238
    %272 = vmatprep.subr.bf16.mxu0 %v241
    %273 = vmatpush1.bf16.msra.mxu0 %v240
    %274 = vmatprep.subr.bf16.mxu0 %v243
    %275 = vmatpush1.bf16.msra.mxu0 %v242
    %276 = vmatprep.subr.bf16.mxu0 %v245
    %277 = vmatpush1.bf16.msra.mxu0 %v244
    %278 = vmatprep.subr.bf16.mxu0 0
    %279 = vmatpush1.bf16.msra.mxu0 0
    %280 = vmatprep.subr.bf16.mxu0 0
    %281 = vmatpush1.bf16.msra.mxu0 0
    %282 = vmatprep.subr.bf16.mxu0 0
    %283 = vmatpush1.bf16.msra.mxu0 0
    %284 = vmatprep.subr.bf16.mxu0 0
    %285 = vmatpush1.bf16.msra.mxu0 0
    %286 = vmatprep.subr.bf16.mxu0 0
    %287 = vmatpush1.bf16.msra.mxu0 0
    %288 = vmatprep.subr.bf16.mxu0 0
    %289 = vmatpush1.bf16.msra.mxu0 0
    %290 = vmatprep.subr.bf16.mxu0 0
    %291 = vmatpush1.bf16.msra.mxu0 0
    %292 = vmatprep.subr.bf16.mxu0 0
    %293 = vmatpush1.bf16.msra.mxu0 0
    %294 = vmatprep.mubr.bf16.mxu0 0
    %295 = vmatmul.mubr.bf16.gmra.mrb[0].mxu0 %v166
    %v296 = vpop.f32.mrb[0].mxu0
    %v297 = vadd.f32 %v127, %v296
    %v298 = vpop.f32.mrb[0].mxu0
    %v299 = vadd.f32 %v131, %v298
    %v300 = vpop.f32.mrb[0].mxu0
    %v301 = vadd.f32 %v127, %v300
    %v302 = vpop.f32.mrb[0].mxu0
    %v303 = vadd.f32 %v131, %v302
    %304 = vmatprep.mubr.bf16.mxu0 0
    %305 = vmatmul.mubr.bf16.gmra.mrb[0].mxu0 %v167
    %v306 = vpop.f32.mrb[0].mxu0
    %v307 = vadd.f32 %v127, %v306
    %v308 = vpop.f32.mrb[0].mxu0
    %v309 = vadd.f32 %v131, %v308
    %v310 = vpop.f32.mrb[0].mxu0
    %v311 = vadd.f32 %v127, %v310
    %v312 = vpop.f32.mrb[0].mxu0
    %v313 = vadd.f32 %v131, %v312
    %314 = vmatprep.mubr.bf16.mxu0 0
    %315 = vmatmul.mubr.bf16.gmra.mrb[0].mxu0 %v168
    %v316 = vpop.f32.mrb[0].mxu0
    %v317 = vadd.f32 %v127, %v316
    %v318 = vpop.f32.mrb[0].mxu0
    %v319 = vadd.f32 %v131, %v318
    %v320 = vpop.f32.mrb[0].mxu0
    %v321 = vadd.f32 %v127, %v320
    %v322 = vpop.f32.mrb[0].mxu0
    %v323 = vadd.f32 %v131, %v322
    %324 = vmatprep.mubr.bf16.mxu0 0
    %325 = vmatmul.mubr.bf16.gmra.mrb[0].mxu0 %v169
    %v326 = vpop.f32.mrb[0].mxu0
    %v327 = vadd.f32 %v127, %v326
    %v328 = vpop.f32.mrb[0].mxu0
    %v329 = vadd.f32 %v131, %v328
    %v330 = vpop.f32.mrb[0].mxu0
    %v331 = vadd.f32 %v127, %v330
    %v332 = vpop.f32.mrb[0].mxu0
    %v333 = vadd.f32 %v131, %v332
    %334 = vmatprep.mubr.bf16.mxu0 0
    %335 = vmatmul.mubr.bf16.gmra.mrb[0].mxu0 %v170
    %v336 = vpop.f32.mrb[0].mxu0
    %v337 = vadd.f32 %v127, %v336
    %v338 = vpop.f32.mrb[0].mxu0
    %v339 = vadd.f32 %v131, %v338
    %v340 = vpop.f32.mrb[0].mxu0
    %v341 = vadd.f32 %v127, %v340
    %v342 = vpop.f32.mrb[0].mxu0
    %v343 = vadd.f32 %v131, %v342
    %344 = vmatprep.mubr.bf16.mxu0 0
    %345 = vmatmul.mubr.bf16.gmra.mrb[0].mxu0 %v171
    %v346 = vpop.f32.mrb[0].mxu0
    %v347 = vadd.f32 %v127, %v346
    %v348 = vpop.f32.mrb[0].mxu0
    %v349 = vadd.f32 %v131, %v348
    %v350 = vpop.f32.mrb[0].mxu0
    %v351 = vadd.f32 %v127, %v350
    %v352 = vpop.f32.mrb[0].mxu0
    %v353 = vadd.f32 %v131, %v352
    %354 = vmatprep.mubr.bf16.mxu0 0
    %355 = vmatmul.mubr.bf16.gmra.mrb[0].mxu0 %v172
    %v356 = vpop.f32.mrb[0].mxu0
    %v357 = vadd.f32 %v127, %v356
    %v358 = vpop.f32.mrb[0].mxu0
    %v359 = vadd.f32 %v131, %v358
    %v360 = vpop.f32.mrb[0].mxu0
    %v361 = vadd.f32 %v127, %v360
    %v362 = vpop.f32.mrb[0].mxu0
    %v363 = vadd.f32 %v131, %v362
    %364 = vmatprep.mubr.bf16.mxu0 0
    %365 = vmatmul.mubr.bf16.gmra.mrb[0].mxu0 %v173
    %v366 = vpop.f32.mrb[0].mxu0
    %v367 = vadd.f32 %v127, %v366
    %v368 = vpop.f32.mrb[0].mxu0
    %v369 = vadd.f32 %v131, %v368
    %v370 = vpop.f32.mrb[0].mxu0
    %v371 = vadd.f32 %v127, %v370
    %v372 = vpop.f32.mrb[0].mxu0
    %v373 = vadd.f32 %v131, %v372
    %374 = vdwg.mxu0
    %v375 = vpack.c.bf16 %v301, %v297
    %v376 = vpack.c.bf16 %v303, %v299
    %v377 = vpack.c.bf16 %v311, %v307
    %v378 = vpack.c.bf16 %v313, %v309
    %v379 = vpack.c.bf16 %v321, %v317
    %v380 = vpack.c.bf16 %v323, %v319
    %v381 = vpack.c.bf16 %v331, %v327
    %v382 = vpack.c.bf16 %v333, %v329
    %v383 = vpack.c.bf16 %v341, %v337
    %v384 = vpack.c.bf16 %v343, %v339
    %v385 = vpack.c.bf16 %v351, %v347
    %v386 = vpack.c.bf16 %v353, %v349
    %v387 = vpack.c.bf16 %v361, %v357
    %v388 = vpack.c.bf16 %v363, %v359
    %v389 = vpack.c.bf16 %v371, %v367
    %v390 = vpack.c.bf16 %v373, %v369
    %v407 = vunpack.c.l.b16 %v375
    %v408 = vunpack.c.l.b16 %v376
    %v409 = vunpack.c.h.b16 %v375
    %v410 = vunpack.c.h.b16 %v376
    %v411 = vunpack.c.l.b16 %v377
    %v412 = vunpack.c.l.b16 %v378
    %v413 = vunpack.c.h.b16 %v377
    %v414 = vunpack.c.h.b16 %v378
    %v415 = vunpack.c.l.b16 %v379
    %v416 = vunpack.c.l.b16 %v380
    %v417 = vunpack.c.h.b16 %v379
    %v418 = vunpack.c.h.b16 %v380
    %v419 = vunpack.c.l.b16 %v381
    %v420 = vunpack.c.l.b16 %v382
    %v421 = vunpack.c.h.b16 %v381
    %v422 = vunpack.c.h.b16 %v382
    %v423 = vunpack.c.l.b16 %v383
    %v424 = vunpack.c.l.b16 %v384
    %v425 = vunpack.c.h.b16 %v383
    %v426 = vunpack.c.h.b16 %v384
    %v427 = vunpack.c.l.b16 %v385
    %v428 = vunpack.c.l.b16 %v386
    %v429 = vunpack.c.h.b16 %v385
    %v430 = vunpack.c.h.b16 %v386
    %v431 = vunpack.c.l.b16 %v387
    %v432 = vunpack.c.l.b16 %v388
    %v433 = vunpack.c.h.b16 %v387
    %v434 = vunpack.c.h.b16 %v388
    %v435 = vunpack.c.l.b16 %v389
    %v436 = vunpack.c.l.b16 %v390
    %v437 = vunpack.c.h.b16 %v389
    %v438 = vunpack.c.h.b16 %v390
    %v439 = vpack.c.b16 %v408, %v407
    %v440 = vpack.c.b16 %v410, %v409
    %v441 = vpack.c.b16 %v412, %v411
    %v442 = vpack.c.b16 %v414, %v413
    %v443 = vpack.c.b16 %v416, %v415
    %v444 = vpack.c.b16 %v418, %v417
    %v445 = vpack.c.b16 %v420, %v419
    %v446 = vpack.c.b16 %v422, %v421
    %v447 = vpack.c.b16 %v424, %v423
    %v448 = vpack.c.b16 %v426, %v425
    %v449 = vpack.c.b16 %v428, %v427
    %v450 = vpack.c.b16 %v430, %v429
    %v451 = vpack.c.b16 %v432, %v431
    %v452 = vpack.c.b16 %v434, %v433
    %v453 = vpack.c.b16 %v436, %v435
    %v454 = vpack.c.b16 %v438, %v437
    %471 = vst [vmem:[#allocation11] sm:$0xff] %v439
    %472 = vst [vmem:[#allocation11 + $0x8] sm:$0xff] %v440
    %473 = vst [vmem:[#allocation11 + $0x10] sm:$0xff] %v441
    %474 = vst [vmem:[#allocation11 + $0x18] sm:$0xff] %v442
    %475 = vst [vmem:[#allocation11 + $0x20] sm:$0xff] %v443
    %476 = vst [vmem:[#allocation11 + $0x28] sm:$0xff] %v444
    %477 = vst [vmem:[#allocation11 + $0x30] sm:$0xff] %v445
    %478 = vst [vmem:[#allocation11 + $0x38] sm:$0xff] %v446
    %479 = vst [vmem:[#allocation11 + $0x40] sm:$0xff] %v447
    %480 = vst [vmem:[#allocation11 + $0x48] sm:$0xff] %v448
    %481 = vst [vmem:[#allocation11 + $0x50] sm:$0xff] %v449
    %482 = vst [vmem:[#allocation11 + $0x58] sm:$0xff] %v450
    %483 = vst [vmem:[#allocation11 + $0x60] sm:$0xff] %v451
    %484 = vst [vmem:[#allocation11 + $0x68] sm:$0xff] %v452
    %485 = vst [vmem:[#allocation11 + $0x70] sm:$0xff] %v453
    %486 = vst [vmem:[#allocation11 + $0x78] sm:$0xff] %v454
    %v487 = vld [vmem:[#allocation8] sm:$0xff]
    %v488 = vld [vmem:[#allocation8 + $0x8] sm:$0xff]
    %489 = vmatprep.subr.mxu0 %v299
    %490 = vmatpush1.xpose.msra.mxu0 %v297
    %491 = vmatprep.subr.mxu0 %v303
    %492 = vmatpush1.xpose.msra.mxu0 %v301
    %493 = vmatprep.subr.mxu0 %v309
    %494 = vmatpush1.xpose.msra.mxu0 %v307
    %495 = vmatprep.subr.mxu0 %v313
    %496 = vmatpush1.xpose.msra.mxu0 %v311
    %497 = vmatprep.subr.mxu0 %v319
    %498 = vmatpush1.xpose.msra.mxu0 %v317
    %499 = vmatprep.subr.mxu0 %v323
    %500 = vmatpush1.xpose.msra.mxu0 %v321
    %501 = vmatprep.subr.mxu0 %v329
    %502 = vmatpush1.xpose.msra.mxu0 %v327
    %503 = vmatprep.subr.mxu0 %v333
    %504 = vmatpush1.xpose.msra.mxu0 %v331
    %505 = vmatprep.subr.mxu0 %v339
    %506 = vmatpush1.xpose.msra.mxu0 %v337
    %507 = vmatprep.subr.mxu0 %v343
    %508 = vmatpush1.xpose.msra.mxu0 %v341
    %509 = vmatprep.subr.mxu0 %v349
    %510 = vmatpush1.xpose.msra.mxu0 %v347
    %511 = vmatprep.subr.mxu0 %v353
    %512 = vmatpush1.xpose.msra.mxu0 %v351
    %513 = vmatprep.subr.mxu0 %v359
    %514 = vmatpush1.xpose.msra.mxu0 %v357
    %515 = vmatprep.subr.mxu0 %v363
    %516 = vmatpush1.xpose.msra.mxu0 %v361
    %517 = vmatprep.subr.mxu0 %v369
    %518 = vmatpush1.xpose.msra.mxu0 %v367
    %519 = vmatprep.subr.mxu0 %v373
    %520 = vmatpush1.xpose.msra.mxu0 %v371
    %521 = vmatprep.subr.mxu0 0.0
    %522 = vmatpush1.xpose.msra.mxu0 0.0
    %523 = vmatprep.subr.mxu0 0.0
    %524 = vmatpush1.xpose.msra.mxu0 0.0
    %525 = vmatprep.subr.mxu0 0.0
    %526 = vmatpush1.xpose.msra.mxu0 0.0
    %527 = vmatprep.subr.mxu0 0.0
    %528 = vmatpush1.xpose.msra.mxu0 0.0
    %529 = vmatprep.subr.mxu0 0.0
    %530 = vmatpush1.xpose.msra.mxu0 0.0
    %531 = vmatprep.subr.mxu0 0.0
    %532 = vmatpush1.xpose.msra.mxu0 0.0
    %533 = vmatprep.subr.mxu0 0.0
    %534 = vmatpush1.xpose.msra.mxu0 0.0
    %535 = vmatprep.subr.mxu0 0.0
    %536 = vmatpush1.xpose.msra.mxu0 0.0
    %537 = vmatprep.subr.mxu0 0.0
    %538 = vmatpush1.xpose.msra.mxu0 0.0
    %539 = vmatprep.subr.mxu0 0.0
    %540 = vmatpush1.xpose.msra.mxu0 0.0
    %541 = vmatprep.subr.mxu0 0.0
    %542 = vmatpush1.xpose.msra.mxu0 0.0
    %543 = vmatprep.subr.mxu0 0.0
    %544 = vmatpush1.xpose.msra.mxu0 0.0
    %545 = vmatprep.subr.mxu0 0.0
    %546 = vmatpush1.xpose.msra.mxu0 0.0
    %547 = vmatprep.subr.mxu0 0.0
    %548 = vmatpush1.xpose.msra.mxu0 0.0
    %549 = vmatprep.subr.mxu0 0.0
    %550 = vmatpush1.xpose.msra.mxu0 0.0
    %551 = vmatprep.subr.mxu0 0.0
    %552 = vmatpush1.xpose.msra.mxu0 0.0
    %553 = vmatprep.mubr.f32.mxu0 %v488
    %554 = vmatmul.mubr.f32.gmra.mrb[0].mxu0 %v487
    %v555 = vpop.f32.mrb[0].mxu0
    %v556 = vadd.f32 0.0, %v555
    %v557 = vpop.f32.mrb[0].mxu0
    %558 = vdwg.mxu0
    %559 = vst [vmem:[#allocation12] sm:$0xff] %v556
    %v560 = vld [vmem:[#allocation10] sm:$0xff]
    %v561 = vld [vmem:[#allocation10 + $0x8] sm:$0xff]
    %v562 = vld [vmem:[#allocation10 + $0x10] sm:$0xff]
    %v563 = vld [vmem:[#allocation10 + $0x18] sm:$0xff]
    %v564 = vld [vmem:[#allocation10 + $0x20] sm:$0xff]
    %v565 = vld [vmem:[#allocation10 + $0x28] sm:$0xff]
    %v566 = vld [vmem:[#allocation10 + $0x30] sm:$0xff]
    %v567 = vld [vmem:[#allocation10 + $0x38] sm:$0xff]
    %v568 = vld [vmem:[#allocation10 + $0x40] sm:$0xff]
    %v569 = vld [vmem:[#allocation10 + $0x48] sm:$0xff]
    %v570 = vld [vmem:[#allocation10 + $0x50] sm:$0xff]
    %v571 = vld [vmem:[#allocation10 + $0x58] sm:$0xff]
    %v572 = vld [vmem:[#allocation10 + $0x60] sm:$0xff]
    %v573 = vld [vmem:[#allocation10 + $0x68] sm:$0xff]
    %v574 = vld [vmem:[#allocation10 + $0x70] sm:$0xff]
    %v575 = vld [vmem:[#allocation10 + $0x78] sm:$0xff]
    %v576 = vld [vmem:[#allocation10 + $0x80] sm:$0xff]
    %v577 = vld [vmem:[#allocation10 + $0x88] sm:$0xff]
    %v578 = vld [vmem:[#allocation10 + $0x90] sm:$0xff]
    %v579 = vld [vmem:[#allocation10 + $0x98] sm:$0xff]
    %v580 = vld [vmem:[#allocation10 + $0xa0] sm:$0xff]
    %v581 = vld [vmem:[#allocation10 + $0xa8] sm:$0xff]
    %v582 = vld [vmem:[#allocation10 + $0xb0] sm:$0xff]
    %v583 = vld [vmem:[#allocation10 + $0xb8] sm:$0xff]
    %v584 = vld [vmem:[#allocation10 + $0xc0] sm:$0xff]
    %v585 = vld [vmem:[#allocation10 + $0xc8] sm:$0xff]
    %v586 = vld [vmem:[#allocation10 + $0xd0] sm:$0xff]
    %v587 = vld [vmem:[#allocation10 + $0xd8] sm:$0xff]
    %v588 = vld [vmem:[#allocation10 + $0xe0] sm:$0xff]
    %v589 = vld [vmem:[#allocation10 + $0xe8] sm:$0xff]
    %v590 = vld [vmem:[#allocation10 + $0xf0] sm:$0xff]
    %v591 = vld [vmem:[#allocation10 + $0xf8] sm:$0xff]
    %592 = vmatprep.subr.mxu0 0.0
    %593 = vmatpush1.msra.mxu0 %v560
    %594 = vmatprep.subr.mxu0 0.0
    %595 = vmatpush1.msra.mxu0 %v561
    %596 = vmatprep.subr.mxu0 0.0
    %597 = vmatpush1.msra.mxu0 %v562
    %598 = vmatprep.subr.mxu0 0.0
    %599 = vmatpush1.msra.mxu0 %v563
    %600 = vmatprep.subr.mxu0 0.0
    %601 = vmatpush1.msra.mxu0 %v564
    %602 = vmatprep.subr.mxu0 0.0
    %603 = vmatpush1.msra.mxu0 %v565
    %604 = vmatprep.subr.mxu0 0.0
    %605 = vmatpush1.msra.mxu0 %v566
    %606 = vmatprep.subr.mxu0 0.0
    %607 = vmatpush1.msra.mxu0 %v567
    %608 = vmatprep.subr.mxu0 0.0
    %609 = vmatpush1.msra.mxu0 %v568
    %610 = vmatprep.subr.mxu0 0.0
    %611 = vmatpush1.msra.mxu0 %v569
    %612 = vmatprep.subr.mxu0 0.0
    %613 = vmatpush1.msra.mxu0 %v570
    %614 = vmatprep.subr.mxu0 0.0
    %615 = vmatpush1.msra.mxu0 %v571
    %616 = vmatprep.subr.mxu0 0.0
    %617 = vmatpush1.msra.mxu0 %v572
    %618 = vmatprep.subr.mxu0 0.0
    %619 = vmatpush1.msra.mxu0 %v573
    %620 = vmatprep.subr.mxu0 0.0
    %621 = vmatpush1.msra.mxu0 %v574
    %622 = vmatprep.subr.mxu0 0.0
    %623 = vmatpush1.msra.mxu0 %v575
    %624 = vmatprep.subr.mxu0 0.0
    %625 = vmatpush1.msra.mxu0 %v576
    %626 = vmatprep.subr.mxu0 0.0
    %627 = vmatpush1.msra.mxu0 %v577
    %628 = vmatprep.subr.mxu0 0.0
    %629 = vmatpush1.msra.mxu0 %v578
    %630 = vmatprep.subr.mxu0 0.0
    %631 = vmatpush1.msra.mxu0 %v579
    %632 = vmatprep.subr.mxu0 0.0
    %633 = vmatpush1.msra.mxu0 %v580
    %634 = vmatprep.subr.mxu0 0.0
    %635 = vmatpush1.msra.mxu0 %v581
    %636 = vmatprep.subr.mxu0 0.0
    %637 = vmatpush1.msra.mxu0 %v582
    %638 = vmatprep.subr.mxu0 0.0
    %639 = vmatpush1.msra.mxu0 %v583
    %640 = vmatprep.subr.mxu0 0.0
    %641 = vmatpush1.msra.mxu0 %v584
    %642 = vmatprep.subr.mxu0 0.0
    %643 = vmatpush1.msra.mxu0 %v585
    %644 = vmatprep.subr.mxu0 0.0
    %645 = vmatpush1.msra.mxu0 %v586
    %646 = vmatprep.subr.mxu0 0.0
    %647 = vmatpush1.msra.mxu0 %v587
    %648 = vmatprep.subr.mxu0 0.0
    %649 = vmatpush1.msra.mxu0 %v588
    %650 = vmatprep.subr.mxu0 0.0
    %651 = vmatpush1.msra.mxu0 %v589
    %652 = vmatprep.subr.mxu0 0.0
    %653 = vmatpush1.msra.mxu0 %v590
    %654 = vmatprep.subr.mxu0 0.0
    %655 = vmatpush1.msra.mxu0 %v591
    %656 = vmatprep.mubr.f32.mxu0 %v299
    %657 = vmatmul.mubr.f32.gmra.mrb[0].mxu0 %v297
    %v658 = vpop.f32.mrb[0].mxu0
    %v659 = vadd.f32 0.0, %v658
    %v660 = vpop.f32.mrb[0].mxu0
    %661 = vmatprep.mubr.f32.mxu0 %v303
    %662 = vmatmul.mubr.f32.gmra.mrb[0].mxu0 %v301
    %v663 = vpop.f32.mrb[0].mxu0
    %v664 = vadd.f32 0.0, %v663
    %v665 = vpop.f32.mrb[0].mxu0
    %666 = vmatprep.mubr.f32.mxu0 %v309
    %667 = vmatmul.mubr.f32.gmra.mrb[0].mxu0 %v307
    %v668 = vpop.f32.mrb[0].mxu0
    %v669 = vadd.f32 0.0, %v668
    %v670 = vpop.f32.mrb[0].mxu0
    %671 = vmatprep.mubr.f32.mxu0 %v313
    %672 = vmatmul.mubr.f32.gmra.mrb[0].mxu0 %v311
    %v673 = vpop.f32.mrb[0].mxu0
    %v674 = vadd.f32 0.0, %v673
    %v675 = vpop.f32.mrb[0].mxu0
    %676 = vmatprep.mubr.f32.mxu0 %v319
    %677 = vmatmul.mubr.f32.gmra.mrb[0].mxu0 %v317
    %v678 = vpop.f32.mrb[0].mxu0
    %v679 = vadd.f32 0.0, %v678
    %v680 = vpop.f32.mrb[0].mxu0
    %681 = vmatprep.mubr.f32.mxu0 %v323
    %682 = vmatmul.mubr.f32.gmra.mrb[0].mxu0 %v321
    %v683 = vpop.f32.mrb[0].mxu0
    %v684 = vadd.f32 0.0, %v683
    %v685 = vpop.f32.mrb[0].mxu0
    %686 = vmatprep.mubr.f32.mxu0 %v329
    %687 = vmatmul.mubr.f32.gmra.mrb[0].mxu0 %v327
    %v688 = vpop.f32.mrb[0].mxu0
    %v689 = vadd.f32 0.0, %v688
    %v690 = vpop.f32.mrb[0].mxu0
    %691 = vmatprep.mubr.f32.mxu0 %v333
    %692 = vmatmul.mubr.f32.gmra.mrb[0].mxu0 %v331
    %v693 = vpop.f32.mrb[0].mxu0
    %v694 = vadd.f32 0.0, %v693
    %v695 = vpop.f32.mrb[0].mxu0
    %696 = vmatprep.mubr.f32.mxu0 %v339
    %697 = vmatmul.mubr.f32.gmra.mrb[0].mxu0 %v337
    %v698 = vpop.f32.mrb[0].mxu0
    %v699 = vadd.f32 0.0, %v698
    %v700 = vpop.f32.mrb[0].mxu0
    %701 = vmatprep.mubr.f32.mxu0 %v343
    %702 = vmatmul.mubr.f32.gmra.mrb[0].mxu0 %v341
    %v703 = vpop.f32.mrb[0].mxu0
    %v704 = vadd.f32 0.0, %v703
    %v705 = vpop.f32.mrb[0].mxu0
    %706 = vmatprep.mubr.f32.mxu0 %v349
    %707 = vmatmul.mubr.f32.gmra.mrb[0].mxu0 %v347
    %v708 = vpop.f32.mrb[0].mxu0
    %v709 = vadd.f32 0.0, %v708
    %v710 = vpop.f32.mrb[0].mxu0
    %711 = vmatprep.mubr.f32.mxu0 %v353
    %712 = vmatmul.mubr.f32.gmra.mrb[0].mxu0 %v351
    %v713 = vpop.f32.mrb[0].mxu0
    %v714 = vadd.f32 0.0, %v713
    %v715 = vpop.f32.mrb[0].mxu0
    %716 = vmatprep.mubr.f32.mxu0 %v359
    %717 = vmatmul.mubr.f32.gmra.mrb[0].mxu0 %v357
    %v718 = vpop.f32.mrb[0].mxu0
    %v719 = vadd.f32 0.0, %v718
    %v720 = vpop.f32.mrb[0].mxu0
    %721 = vmatprep.mubr.f32.mxu0 %v363
    %722 = vmatmul.mubr.f32.gmra.mrb[0].mxu0 %v361
    %v723 = vpop.f32.mrb[0].mxu0
    %v724 = vadd.f32 0.0, %v723
    %v725 = vpop.f32.mrb[0].mxu0
    %726 = vmatprep.mubr.f32.mxu0 %v369
    %727 = vmatmul.mubr.f32.gmra.mrb[0].mxu0 %v367
    %v728 = vpop.f32.mrb[0].mxu0
    %v729 = vadd.f32 0.0, %v728
    %v730 = vpop.f32.mrb[0].mxu0
    %731 = vmatprep.mubr.f32.mxu0 %v373
    %732 = vmatmul.mubr.f32.gmra.mrb[0].mxu0 %v371
    %v733 = vpop.f32.mrb[0].mxu0
    %v734 = vadd.f32 0.0, %v733
    %v735 = vpop.f32.mrb[0].mxu0
    %736 = vdwg.mxu0
    %737 = vst [vmem:[#allocation14] sm:$0xff] %v659
    %738 = vst [vmem:[#allocation14 + $0x8] sm:$0xff] %v664
    %739 = vst [vmem:[#allocation14 + $0x10] sm:$0xff] %v669
    %740 = vst [vmem:[#allocation14 + $0x18] sm:$0xff] %v674
    %741 = vst [vmem:[#allocation14 + $0x20] sm:$0xff] %v679
    %742 = vst [vmem:[#allocation14 + $0x28] sm:$0xff] %v684
    %743 = vst [vmem:[#allocation14 + $0x30] sm:$0xff] %v689
    %744 = vst [vmem:[#allocation14 + $0x38] sm:$0xff] %v694
    %745 = vst [vmem:[#allocation14 + $0x40] sm:$0xff] %v699
    %746 = vst [vmem:[#allocation14 + $0x48] sm:$0xff] %v704
    %747 = vst [vmem:[#allocation14 + $0x50] sm:$0xff] %v709
    %748 = vst [vmem:[#allocation14 + $0x58] sm:$0xff] %v714
    %749 = vst [vmem:[#allocation14 + $0x60] sm:$0xff] %v719
    %750 = vst [vmem:[#allocation14 + $0x68] sm:$0xff] %v724
    %751 = vst [vmem:[#allocation14 + $0x70] sm:$0xff] %v729
    %752 = vst [vmem:[#allocation14 + $0x78] sm:$0xff] %v734
    // Predicated region
    $region42: #{tpu_custom_call.1} parent=1 // pred_check
      _
    $region43: #{tpu_custom_call.1} parent=1 // pred_check_branch
      %754 = sbr.rel (0) target = $region45
    $region44: #{tpu_custom_call.1} parent=1 // pred_region
      %s756 = ssub.s32 2048, 2048
      %757 = vsyncadd [#allocation4], %s756
      %s758 = sshll.u32 [#allocation11], 4
      %s759 = int_to_ptr.vmem [resolvable:$true] %s758
      %764 = dma.vmem_to_hbm [thread:$0]  %s759, 2048, %s5, [#allocation4], 128, 128, 8
    $region45: #{tpu_custom_call.1} parent=1 // pred_fallthru
      _
    // Predicated region
    $region46: #{tpu_custom_call.1} parent=1 // pred_check
      _
    $region47: #{tpu_custom_call.1} parent=1 // pred_check_branch
      %766 = sbr.rel (0) target = $region49
    $region48: #{tpu_custom_call.1} parent=1 // pred_region
      %s768 = ssub.s32 128, 128
      %769 = vsyncadd [#allocation13], %s768
      %s771 = sshll.u32 [#allocation12], 4
      %s772 = int_to_ptr.vmem [resolvable:$true] %s771
      %774 = dma.vmem_to_hbm [thread:$0]  %s772, 128, %s6, [#allocation13]
    $region49: #{tpu_custom_call.1} parent=1 // pred_fallthru
      _
    // Predicated region
    $region50: #{tpu_custom_call.1} parent=1 // pred_check
      _
    $region51: #{tpu_custom_call.1} parent=1 // pred_check_branch
      %776 = sbr.rel (0) target = $region53
    $region52: #{tpu_custom_call.1} parent=1 // pred_region
      %s778 = ssub.s32 2048, 2048
      %779 = vsyncadd [#allocation13], %s778
      %s780 = sshll.u32 [#allocation14], 4
      %s781 = int_to_ptr.vmem [resolvable:$true] %s780
      %786 = dma.vmem_to_hbm [thread:$0]  %s781, 2048, %s7, [#allocation13], 128, 128, 8
    $region53: #{tpu_custom_call.1} parent=1 // pred_fallthru
      _
    // Predicated region
    $region54: #{tpu_custom_call.1} parent=1 // pred_check
      _
    $region55: #{tpu_custom_call.1} parent=1 // pred_check_branch
      %788 = sbr.rel (0) target = $region57
    $region56: #{tpu_custom_call.1} parent=1 // pred_region
      %789 = dma.done [#allocation4], 2048
    $region57: #{tpu_custom_call.1} parent=1 // pred_fallthru
      _
    // Predicated region
    $region58: #{tpu_custom_call.1} parent=1 // pred_check
      _
    $region59: #{tpu_custom_call.1} parent=1 // pred_check_branch
      %791 = sbr.rel (0) target = $region61
    $region60: #{tpu_custom_call.1} parent=1 // pred_region
      %792 = dma.done [#allocation13], 128
    $region61: #{tpu_custom_call.1} parent=1 // pred_fallthru
      _
    // Predicated region
    $region62: #{tpu_custom_call.1} parent=1 // pred_check
      _
    $region63: #{tpu_custom_call.1} parent=1 // pred_check_branch
      %794 = sbr.rel (0) target = $region65
    $region64: #{tpu_custom_call.1} parent=1 // pred_region
      %795 = dma.done [#allocation13], 2048
    $region65: #{tpu_custom_call.1} parent=1 // pred_fallthru
      _
    %796 = vsyncpa [#allocation3], 1
    %797 = vsyncpa [#allocation6], 1
    %798 = vsyncpa [#allocation9], 1
    %799 = vsyncpa [#allocation4], 1
    %800 = vsyncpa [#allocation13], 1

</llo_original>
